<compile_context>
chip_gen: v7x
topology: tpu7x:2x2x1
jax: 0.10.0
libtpu: 0.0.40
codegen_flags: <defaults>
</compile_context>

<pallas_src>
import jax
import jax.numpy as jnp
from jax.experimental import pallas as pl
from jax.experimental.pallas import tpu as pltpu


# ------------------------------ Pallas kernel ------------------------------
def _fused_kernel(w_ref, p_ref, b_ref, o_ref):
    # w_ref: VMEM (12, 27)   folded 3x3 weights  [k, ci*9 + kh*3 + kw]
    # p_ref: VMEM (27, M)    im2col patches for this batch chunk (M = nb*Ho*Wo)
    # b_ref: VMEM (12, M)    folded bias map, tiled over the chunk's images
    # o_ref: VMEM (12, M)    lane-dense output slab
    acc = jnp.dot(w_ref[...], p_ref[...], preferred_element_type=jnp.float32)
    o_ref[...] = jnp.maximum(acc + b_ref[...], 0.0)


# --------------------- host-side constant folding (once) --------------------
def fold_params(params, H, W):
    """x-independent folding of all four convs; call ONCE per parameter set."""
    Ho, Wo = H + 2, W + 2

    w1 = params["w1"].reshape(6).astype(jnp.float32)
    w2 = params["w2"].astype(jnp.float32)            # (12, 6, 3, 3)
    w3 = params["w3"].reshape(6).astype(jnp.float32)
    w4 = params["w4"].astype(jnp.float32)            # (12, 6, 3, 3)
    b1 = params["b1"].astype(jnp.float32)
    b2 = params["b2"].astype(jnp.float32)
    b3 = params["b3"].astype(jnp.float32)
    b4 = params["b4"].astype(jnp.float32)

    # conv1/conv3 are per-channel scales (grouped 1x1): output channel c reads
    # input channel c // 2.  Fold the scale into the 3x3 weights, sum channel
    # pairs, and fold the branch duplication (v3+v4, v7+v8) as the factor 2.
    w2s = (w2 * w1[None, :, None, None]).reshape(12, 3, 2, 3, 3).sum(axis=2)
    w4s = (w4 * w3[None, :, None, None]).reshape(12, 3, 2, 3, 3).sum(axis=2)
    w_eff = (2.0 * (w2s + w4s)).reshape(12, 27)       # [k, ci*9 + kh*3 + kw]

    # Folded bias map: conv2/conv4 (pad=1) applied to the constant per-channel
    # bias images of conv1/conv3 (which are attenuated at the border ring),
    # plus their own biases, times 2.
    maskp = jnp.pad(jnp.ones((Ho, Wo), jnp.float32), ((1, 1), (1, 1)))  # (H+4, W+4)
    wins = jnp.stack(
        [jnp.stack([maskp[kh:kh + Ho, kw:kw + Wo] for kw in range(3)], axis=0)
         for kh in range(3)], axis=0)                 # (3, 3, Ho, Wo)

    def bias_map(w_conv, b_in, b_out):
        w_b = jnp.einsum("kchw,c->khw", w_conv, b_in)              # (12, 3, 3)
        return jnp.einsum("khw,hwxy->kxy", w_b, wins) + b_out[:, None, None]

    bmap = 2.0 * (bias_map(w2, b1, b2) + bias_map(w4, b3, b4))     # (12, Ho, Wo)

    return {"w_eff": jax.device_put(w_eff),
            "bmap": jax.device_put(bmap.reshape(12, Ho * Wo))}


# ------------------------------ forward wrapper -----------------------------
def _pick_batch_block(N, cap=32):
    # One grid step for small batches (avoids per-step overhead dominating);
    # bounded chunks for large batches (bounded VMEM, pipelining, megacore).
    if N <= cap:
        return N
    for nb in range(cap, 0, -1):
        if N % nb == 0:
            return nb
    return 1


def model_forward(x, w_eff, bmap):
    N, C, H, W = x.shape
    assert C == 3
    Ho, Wo = H + 2, W + 2
    HoWo = Ho * Wo

    nb = _pick_batch_block(N)
    G = N // nb
    M = nb * HoWo

    # im2col: layout plumbing only (all FLOPs happen inside the kernel).
    # TODO(synk): at very large N this 9x patch expansion could be built
    # in-kernel from the padded input to avoid the extra HBM traffic.
    xpad = jnp.pad(x, ((0, 0), (0, 0), (2, 2), (2, 2)))        # (N, 3, H+4, W+4)
    taps = [xpad[:, ci, kh:kh + Ho, kw:kw + Wo]
            for ci in range(3) for kh in range(3) for kw in range(3)]
    p = jnp.stack(taps, axis=1).reshape(N, 27, HoWo)           # (N, 27, HoWo)
    p = p.reshape(G, nb, 27, HoWo).transpose(0, 2, 1, 3).reshape(G, 27, M)

    b_tile = jnp.tile(bmap, (1, nb))                           # (12, M)

    cost = pl.CostEstimate(
        flops=2 * 12 * 27 * N * HoWo + 2 * 12 * N * HoWo,
        transcendentals=0,
        bytes_accessed=4 * (G * 27 * M + 12 * M + G * 12 * M + 12 * 27))

    out = pl.pallas_call(
        _fused_kernel,
        out_shape=jax.ShapeDtypeStruct((G, 12, M), jnp.float32),
        grid=(G,),
        in_specs=[
            pl.BlockSpec((12, 27), lambda i: (0, 0)),
            pl.BlockSpec((None, 27, M), lambda i: (i, 0, 0)),
            pl.BlockSpec((12, M), lambda i: (0, 0)),
        ],
        out_specs=pl.BlockSpec((None, 12, M), lambda i: (i, 0, 0)),
        compiler_params=pltpu.CompilerParams(
            dimension_semantics=("parallel",)),
        cost_estimate=cost,
    )(w_eff, p, b_tile)

    # (G, 12, nb*HoWo) -> (N, 12, Ho, Wo)
    out = out.reshape(G, 12, nb, Ho, Wo).transpose(0, 2, 1, 3, 4)
    return out.reshape(N, 12, Ho, Wo)


# ------------------- reference (plain JAX) for verification -------------------
def _conv2d_ref(x, w, b, padding, groups=1):
    out = jax.lax.conv_general_dilated(
        x, w, window_strides=(1, 1),
        padding=[(padding, padding), (padding, padding)],
        dimension_numbers=("NCHW", "OIHW", "NCHW"),
        feature_group_count=groups)
    return out + b[None, :, None, None]


def _model_ref(x, p):
    v1 = _conv2d_ref(x, p["w1"], p["b1"], padding=1, groups=3)
    v3 = _conv2d_ref(v1, p["w2"], p["b2"], padding=1)
    v5 = _conv2d_ref(x, p["w3"], p["b3"], padding=1, groups=3)
    v7 = _conv2d_ref(v5, p["w4"], p["b4"], padding=1)
    return jnp.maximum(v3 + v3 + v7 + v7, 0.0)


if __name__ == "__main__":
    key = jax.random.PRNGKey(0)
    keys = jax.random.split(key, 9)

    params = {
        "w1": 0.3 * jax.random.normal(keys[0], (6, 1, 1, 1), jnp.float32),
        "b1": 0.1 * jax.random.normal(keys[1], (6,), jnp.float32),
        "w2": 0.2 * jax.random.normal(keys[2], (12, 6, 3, 3), jnp.float32),
        "b2": 0.1 * jax.random.normal(keys[3], (12,), jnp.float32),
        "w3": 0.3 * jax.random.normal(keys[4], (6, 1, 1, 1), jnp.float32),
        "b3": 0.1 * jax.random.normal(keys[5], (6,), jnp.float32),
        "w4": 0.2 * jax.random.normal(keys[6], (12, 6, 3, 3), jnp.float32),
        "b4": 0.1 * jax.random.normal(keys[7], (12,), jnp.float32),
    }

    # small shapes consistent with the module: batch=2, C=3, 16x16 spatial
    x1 = jax.random.normal(keys[8], (2, 3, 16, 16), jnp.float32)

    # Constant folding done once per parameter set (not per forward call).
    folded = fold_params(params, 16, 16)
    forward = jax.jit(model_forward)

    out = forward(x1, folded["w_eff"], folded["bmap"])
    out = jax.block_until_ready(out)

    ref = _model_ref(x1, params)
    assert out.shape == ref.shape == (2, 12, 18, 18), (out.shape, ref.shape)
    assert jnp.allclose(out, ref, atol=1e-4, rtol=1e-4), float(
        jnp.max(jnp.abs(out - ref)))

    print("KERNEL_OK")
</pallas_src>

<mosaic_0001>
module attributes {stable_mosaic.version = 11 : i64} {
  func.func @_fused_kernel(%arg0: i32, %arg1: memref<12x27xf32, #tpu.memory_space<vmem>>, %arg2: memref<1x27x648xf32, #tpu.memory_space<vmem>>, %arg3: memref<12x648xf32, #tpu.memory_space<vmem>>, %arg4: memref<1x12x648xf32, #tpu.memory_space<vmem>>) attributes {dimension_semantics = [#tpu.dimension_semantics<parallel>], iteration_bounds = array<i64: 1>, scalar_prefetch = 0 : i64, scratch_operands = 0 : i64, tpu.core_type = #tpu.core_type<tc>, window_params = [{pipeline_mode = #tpu.pipeline_mode<synchronous>, transform_indices = @transform_0, window_bounds = array<i64: 12, 27>}, {transform_indices = @transform_1, window_bounds = array<i64: 1, 27, 648>}, {pipeline_mode = #tpu.pipeline_mode<synchronous>, transform_indices = @transform_2, window_bounds = array<i64: 12, 648>}, {transform_indices = @transform_3, window_bounds = array<i64: 1, 12, 648>}]} {
    %c0 = arith.constant 0 : index
    %c0_0 = arith.constant 0 : index
    %0 = vector.load %arg1[%c0, %c0_0] : memref<12x27xf32, #tpu.memory_space<vmem>>, vector<12x27xf32>
    %c0_1 = arith.constant 0 : index
    %c0_2 = arith.constant 0 : index
    %c0_3 = arith.constant 0 : index
    %1 = vector.load %arg2[%c0_1, %c0_2, %c0_3] : memref<1x27x648xf32, #tpu.memory_space<vmem>>, vector<1x27x648xf32>
    %2 = vector.shape_cast %1 : vector<1x27x648xf32> to vector<27x648xf32>
    %cst = arith.constant dense<0.000000e+00> : vector<12x648xf32>
    %3 = tpu.matmul %0, %2, %cst {dimension_numbers = #tpu.dot_dimension_numbers<[1], [0], [0], [1], [0, 0, 1, 1], [], []>} : vector<12x27xf32>, vector<27x648xf32>, vector<12x648xf32> -> vector<12x648xf32>
    %c0_4 = arith.constant 0 : index
    %c0_5 = arith.constant 0 : index
    %4 = vector.load %arg3[%c0_4, %c0_5] : memref<12x648xf32, #tpu.memory_space<vmem>>, vector<12x648xf32>
    %5 = arith.addf %3, %4 : vector<12x648xf32>
    %cst_6 = arith.constant 0.000000e+00 : f32
    %6 = vector.broadcast %cst_6 : f32 to vector<12x648xf32>
    %7 = arith.maximumf %5, %6 : vector<12x648xf32>
    %c0_7 = arith.constant 0 : index
    %c0_8 = arith.constant 0 : index
    %c0_9 = arith.constant 0 : index
    %8 = vector.load %arg4[%c0_7, %c0_8, %c0_9] : memref<1x12x648xf32, #tpu.memory_space<vmem>>, vector<1x12x648xf32>
    %9 = vector.shape_cast %8 : vector<1x12x648xf32> to vector<12x648xf32>
    %10 = vector.shape_cast %7 : vector<12x648xf32> to vector<1x12x648xf32>
    tpu.vector_store %arg4[%c0_7, %c0_8, %c0_9], %10 {strides = array<i32>} : memref<1x12x648xf32, #tpu.memory_space<vmem>>, vector<1x12x648xf32>,
    return
  }
  func.func @transform_0(%arg0: i32) -> (i32, i32) {
    %c0_i32 = arith.constant 0 : i32
    %c0_i32_0 = arith.constant 0 : i32
    %c0_i32_1 = arith.constant 0 : i32
    return %c0_i32, %c0_i32_0 : i32, i32
  }
  func.func @transform_1(%arg0: i32) -> (i32, i32, i32) {
    %c0_i32 = arith.constant 0 : i32
    %c0_i32_0 = arith.constant 0 : i32
    %c0_i32_1 = arith.constant 0 : i32
    return %arg0, %c0_i32, %c0_i32_0 : i32, i32, i32
  }
  func.func @transform_2(%arg0: i32) -> (i32, i32) {
    %c0_i32 = arith.constant 0 : i32
    %c0_i32_0 = arith.constant 0 : i32
    %c0_i32_1 = arith.constant 0 : i32
    return %c0_i32, %c0_i32_0 : i32, i32
  }
  func.func @transform_3(%arg0: i32) -> (i32, i32, i32) {
    %c0_i32 = arith.constant 0 : i32
    %c0_i32_0 = arith.constant 0 : i32
    %c0_i32_1 = arith.constant 0 : i32
    return %arg0, %c0_i32, %c0_i32_0 : i32, i32, i32
  }
}

</mosaic_0001>

<llo_original>
// kernel: tile.9
$region0: #{tile.9}
  %s0 = inlined_call_operand.vmem [shape: f32[12,2,324], index: 0, kind: input, shape index: {}]
  %s1 = inlined_call_operand.vmem [shape: f32[12,648], index: 1, kind: output, shape index: {}]
  $region1: #{tile.9} parent=0
    #allocation0 [shape = 'u8[147456]{0}', space=vmem, size = 0x24000, scoped, tag = 'scoped mem for input reshape']
    %s3 = sshllo.u32 0, 2
    %s4 = smul.addr 2, 35
    %s5 = scalar_lea.vmem %s0, %s4
    %v6 = vld [vmem:[%s5] sm:%s3]
    %s7 = scalar_lea.vmem [#allocation0], 280
    %8 = vst [vmem:[%s7] sm:%s3] %v6
    %s9 = smul.addr 2, 34
    %s10 = scalar_lea.vmem %s0, %s9
    %v11 = vld [vmem:[%s10] sm:%s3]
    %s12 = scalar_lea.vmem [#allocation0], 272
    %13 = vst [vmem:[%s12] sm:%s3] %v11
    %s14 = smul.addr 2, 33
    %s15 = scalar_lea.vmem %s0, %s14
    %v16 = vld [vmem:[%s15] sm:%s3]
    %s17 = scalar_lea.vmem [#allocation0], 264
    %18 = vst [vmem:[%s17] sm:%s3] %v16
    %s19 = smul.addr 2, 32
    %s20 = scalar_lea.vmem %s0, %s19
    %v21 = vld [vmem:[%s20] sm:%s3]
    %s22 = scalar_lea.vmem [#allocation0], 256
    %23 = vst [vmem:[%s22] sm:%s3] %v21
    %s24 = smul.addr 2, 31
    %s25 = scalar_lea.vmem %s0, %s24
    %v26 = vld [vmem:[%s25] sm:%s3]
    %s27 = scalar_lea.vmem [#allocation0], 248
    %28 = vst [vmem:[%s27] sm:%s3] %v26
    %s29 = smul.addr 2, 30
    %s30 = scalar_lea.vmem %s0, %s29
    %v31 = vld [vmem:[%s30] sm:%s3]
    %s32 = scalar_lea.vmem [#allocation0], 240
    %33 = vst [vmem:[%s32] sm:%s3] %v31
    %s34 = smul.addr 2, 29
    %s35 = scalar_lea.vmem %s0, %s34
    %v36 = vld [vmem:[%s35] sm:%s3]
    %s37 = scalar_lea.vmem [#allocation0], 232
    %38 = vst [vmem:[%s37] sm:%s3] %v36
    %s39 = smul.addr 2, 28
    %s40 = scalar_lea.vmem %s0, %s39
    %v41 = vld [vmem:[%s40] sm:%s3]
    %s42 = scalar_lea.vmem [#allocation0], 224
    %43 = vst [vmem:[%s42] sm:%s3] %v41
    %s44 = smul.addr 2, 27
    %s45 = scalar_lea.vmem %s0, %s44
    %v46 = vld [vmem:[%s45] sm:%s3]
    %s47 = scalar_lea.vmem [#allocation0], 216
    %48 = vst [vmem:[%s47] sm:%s3] %v46
    %s49 = smul.addr 2, 26
    %s50 = scalar_lea.vmem %s0, %s49
    %v51 = vld [vmem:[%s50] sm:%s3]
    %s52 = scalar_lea.vmem [#allocation0], 208
    %53 = vst [vmem:[%s52] sm:%s3] %v51
    %s54 = smul.addr 2, 25
    %s55 = scalar_lea.vmem %s0, %s54
    %v56 = vld [vmem:[%s55] sm:%s3]
    %s57 = scalar_lea.vmem [#allocation0], 200
    %58 = vst [vmem:[%s57] sm:%s3] %v56
    %s59 = smul.addr 2, 24
    %s60 = scalar_lea.vmem %s0, %s59
    %v61 = vld [vmem:[%s60] sm:%s3]
    %s62 = scalar_lea.vmem [#allocation0], 192
    %63 = vst [vmem:[%s62] sm:%s3] %v61
    %s64 = smul.addr 2, 23
    %s65 = scalar_lea.vmem %s0, %s64
    %v66 = vld [vmem:[%s65] sm:%s3]
    %s67 = scalar_lea.vmem [#allocation0], 184
    %68 = vst [vmem:[%s67] sm:%s3] %v66
    %s69 = smul.addr 2, 22
    %s70 = scalar_lea.vmem %s0, %s69
    %v71 = vld [vmem:[%s70] sm:%s3]
    %s72 = scalar_lea.vmem [#allocation0], 176
    %73 = vst [vmem:[%s72] sm:%s3] %v71
    %s74 = smul.addr 2, 21
    %s75 = scalar_lea.vmem %s0, %s74
    %v76 = vld [vmem:[%s75] sm:%s3]
    %s77 = scalar_lea.vmem [#allocation0], 168
    %78 = vst [vmem:[%s77] sm:%s3] %v76
    %s79 = smul.addr 2, 20
    %s80 = scalar_lea.vmem %s0, %s79
    %v81 = vld [vmem:[%s80] sm:%s3]
    %s82 = scalar_lea.vmem [#allocation0], 160
    %83 = vst [vmem:[%s82] sm:%s3] %v81
    %s84 = smul.addr 2, 19
    %s85 = scalar_lea.vmem %s0, %s84
    %v86 = vld [vmem:[%s85] sm:%s3]
    %s87 = scalar_lea.vmem [#allocation0], 152
    %88 = vst [vmem:[%s87] sm:%s3] %v86
    %s89 = smul.addr 2, 18
    %s90 = scalar_lea.vmem %s0, %s89
    %v91 = vld [vmem:[%s90] sm:%s3]
    %s92 = scalar_lea.vmem [#allocation0], 144
    %93 = vst [vmem:[%s92] sm:%s3] %v91
    %s94 = smul.addr 2, 17
    %s95 = scalar_lea.vmem %s0, %s94
    %v96 = vld [vmem:[%s95] sm:%s3]
    %s97 = scalar_lea.vmem [#allocation0], 136
    %98 = vst [vmem:[%s97] sm:%s3] %v96
    %s99 = smul.addr 2, 16
    %s100 = scalar_lea.vmem %s0, %s99
    %v101 = vld [vmem:[%s100] sm:%s3]
    %s102 = scalar_lea.vmem [#allocation0], 128
    %103 = vst [vmem:[%s102] sm:%s3] %v101
    %s104 = smul.addr 2, 15
    %s105 = scalar_lea.vmem %s0, %s104
    %v106 = vld [vmem:[%s105] sm:%s3]
    %s107 = scalar_lea.vmem [#allocation0], 120
    %108 = vst [vmem:[%s107] sm:%s3] %v106
    %s109 = smul.addr 2, 14
    %s110 = scalar_lea.vmem %s0, %s109
    %v111 = vld [vmem:[%s110] sm:%s3]
    %s112 = scalar_lea.vmem [#allocation0], 112
    %113 = vst [vmem:[%s112] sm:%s3] %v111
    %s114 = smul.addr 2, 13
    %s115 = scalar_lea.vmem %s0, %s114
    %v116 = vld [vmem:[%s115] sm:%s3]
    %s117 = scalar_lea.vmem [#allocation0], 104
    %118 = vst [vmem:[%s117] sm:%s3] %v116
    %s119 = smul.addr 2, 12
    %s120 = scalar_lea.vmem %s0, %s119
    %v121 = vld [vmem:[%s120] sm:%s3]
    %s122 = scalar_lea.vmem [#allocation0], 96
    %123 = vst [vmem:[%s122] sm:%s3] %v121
    %s124 = smul.addr 2, 11
    %s125 = scalar_lea.vmem %s0, %s124
    %v126 = vld [vmem:[%s125] sm:%s3]
    %s127 = scalar_lea.vmem [#allocation0], 88
    %128 = vst [vmem:[%s127] sm:%s3] %v126
    %s129 = smul.addr 2, 10
    %s130 = scalar_lea.vmem %s0, %s129
    %v131 = vld [vmem:[%s130] sm:%s3]
    %s132 = scalar_lea.vmem [#allocation0], 80
    %133 = vst [vmem:[%s132] sm:%s3] %v131
    %s134 = smul.addr 2, 9
    %s135 = scalar_lea.vmem %s0, %s134
    %v136 = vld [vmem:[%s135] sm:%s3]
    %s137 = scalar_lea.vmem [#allocation0], 72
    %138 = vst [vmem:[%s137] sm:%s3] %v136
    %s139 = smul.addr 2, 8
    %s140 = scalar_lea.vmem %s0, %s139
    %v141 = vld [vmem:[%s140] sm:%s3]
    %s142 = scalar_lea.vmem [#allocation0], 64
    %143 = vst [vmem:[%s142] sm:%s3] %v141
    %s144 = smul.addr 2, 7
    %s145 = scalar_lea.vmem %s0, %s144
    %v146 = vld [vmem:[%s145] sm:%s3]
    %s147 = scalar_lea.vmem [#allocation0], 56
    %148 = vst [vmem:[%s147] sm:%s3] %v146
    %s149 = smul.addr 2, 6
    %s150 = scalar_lea.vmem %s0, %s149
    %v151 = vld [vmem:[%s150] sm:%s3]
    %s152 = scalar_lea.vmem [#allocation0], 48
    %153 = vst [vmem:[%s152] sm:%s3] %v151
    %s154 = smul.addr 2, 5
    %s155 = scalar_lea.vmem %s0, %s154
    %v156 = vld [vmem:[%s155] sm:%s3]
    %s157 = scalar_lea.vmem [#allocation0], 40
    %158 = vst [vmem:[%s157] sm:%s3] %v156
    %s159 = smul.addr 2, 4
    %s160 = scalar_lea.vmem %s0, %s159
    %v161 = vld [vmem:[%s160] sm:%s3]
    %s162 = scalar_lea.vmem [#allocation0], 32
    %163 = vst [vmem:[%s162] sm:%s3] %v161
    %s164 = smul.addr 2, 3
    %s165 = scalar_lea.vmem %s0, %s164
    %v166 = vld [vmem:[%s165] sm:%s3]
    %s167 = scalar_lea.vmem [#allocation0], 24
    %168 = vst [vmem:[%s167] sm:%s3] %v166
    %s169 = smul.addr 2, 2
    %s170 = scalar_lea.vmem %s0, %s169
    %v171 = vld [vmem:[%s170] sm:%s3]
    %s172 = scalar_lea.vmem [#allocation0], 16
    %173 = vst [vmem:[%s172] sm:%s3] %v171
    %s174 = scalar_lea.vmem %s0, 2
    %v175 = vld [vmem:[%s174] sm:%s3]
    %s176 = scalar_lea.vmem [#allocation0], 8
    %177 = vst [vmem:[%s176] sm:%s3] %v175
    %v178 = vld [vmem:[%s0] sm:%s3]
    %179 = vst [vmem:[#allocation0] sm:%s3] %v178
    %s180 = scalar_lea.vmem [#allocation0], 16
    %v181 = vld [vmem:[%s180] ss:$24 sm:$0xf]
    %s182 = scalar_lea.vmem [#allocation0], 16
    %v183 = vld [vmem:[%s182] ss:$24 sm:$0xf0]
    %vm184 = vcmask 1047556
    %v185 = vsel %vm184, %v183, %v181
    %vm186 = vcmask 556032
    %s187 = scalar_lea.vmem %s1, 16
    %188 = vst.msk [vmem:[%s187] sm:$0xff] %vm186, %v185
    %s189 = scalar_lea.vmem [#allocation0], 208
    %v190 = vld [vmem:[%s189] ss:$24 sm:$0xf]
    %vm191 = vcmask 556032
    %s192 = scalar_lea.vmem %s1, 64
    %193 = vst.msk [vmem:[%s192] sm:$0xf] %vm191, %v190
    %s194 = smov 3
    %v195 = vld [vmem:[#allocation0] ss:$8 sm:%s194]
    %196 = vst [vmem:[%s1] ss:$8 sm:$0x3] %v195
    %s197 = scalar_lea.vmem [#allocation0], 24
    %s198 = smov 3
    %v199 = vld [vmem:[%s197] ss:$8 sm:%s198]
    %s200 = scalar_lea.vmem %s1, 1
    %201 = vst [vmem:[%s200] ss:$8 sm:$0x3] %v199
    %s202 = scalar_lea.vmem [#allocation0], 48
    %s203 = smov 3
    %v204 = vld [vmem:[%s202] ss:$8 sm:%s203]
    %s205 = scalar_lea.vmem %s1, 2
    %206 = vst [vmem:[%s205] ss:$8 sm:$0x3] %v204
    %s207 = scalar_lea.vmem [#allocation0], 72
    %s208 = smov 3
    %v209 = vld [vmem:[%s207] ss:$8 sm:%s208]
    %s210 = scalar_lea.vmem %s1, 3
    %211 = vst [vmem:[%s210] ss:$8 sm:$0x3] %v209
    %s212 = scalar_lea.vmem [#allocation0], 96
    %s213 = smov 3
    %v214 = vld [vmem:[%s212] ss:$8 sm:%s213]
    %s215 = scalar_lea.vmem %s1, 4
    %216 = vst [vmem:[%s215] ss:$8 sm:$0x3] %v214
    %s217 = scalar_lea.vmem [#allocation0], 120
    %s218 = smov 3
    %v219 = vld [vmem:[%s217] ss:$8 sm:%s218]
    %s220 = scalar_lea.vmem %s1, 5
    %221 = vst [vmem:[%s220] ss:$8 sm:$0x3] %v219
    %s222 = scalar_lea.vmem [#allocation0], 144
    %s223 = smov 3
    %v224 = vld [vmem:[%s222] ss:$8 sm:%s223]
    %s225 = scalar_lea.vmem %s1, 6
    %226 = vst [vmem:[%s225] ss:$8 sm:$0x3] %v224
    %s227 = scalar_lea.vmem [#allocation0], 168
    %s228 = smov 3
    %v229 = vld [vmem:[%s227] ss:$8 sm:%s228]
    %s230 = scalar_lea.vmem %s1, 7
    %231 = vst [vmem:[%s230] ss:$8 sm:$0x3] %v229
    %s232 = scalar_lea.vmem [#allocation0], 192
    %s233 = smov 3
    %v234 = vld [vmem:[%s232] ss:$8 sm:%s233]
    %s235 = scalar_lea.vmem %s1, 48
    %236 = vst [vmem:[%s235] ss:$8 sm:$0x3] %v234
    %s237 = scalar_lea.vmem [#allocation0], 216
    %s238 = smov 3
    %v239 = vld [vmem:[%s237] ss:$8 sm:%s238]
    %s240 = scalar_lea.vmem %s1, 49
    %241 = vst [vmem:[%s240] ss:$8 sm:$0x3] %v239
    %s242 = scalar_lea.vmem [#allocation0], 240
    %s243 = smov 3
    %v244 = vld [vmem:[%s242] ss:$8 sm:%s243]
    %s245 = scalar_lea.vmem %s1, 50
    %246 = vst [vmem:[%s245] ss:$8 sm:$0x3] %v244
    %s247 = scalar_lea.vmem [#allocation0], 264
    %s248 = smov 3
    %v249 = vld [vmem:[%s247] ss:$8 sm:%s248]
    %s250 = scalar_lea.vmem %s1, 51
    %251 = vst [vmem:[%s250] ss:$8 sm:$0x3] %v249
    %s252 = scalar_lea.vmem [#allocation0], 17
    %v253 = vld [vmem:[%s252] ss:$24 sm:$0xf]
    %s254 = scalar_lea.vmem [#allocation0], 17
    %v255 = vld [vmem:[%s254] ss:$24 sm:$0xf0]
    %vm256 = vcmask 1047556
    %v257 = vsel %vm256, %v255, %v253
    %s258 = scalar_lea.vmem [#allocation0], 17
    %v259 = vld [vmem:[%s258] ss:$24 sm:$0xf]
    %s260 = scalar_lea.vmem [#allocation0], 17
    %v261 = vld [vmem:[%s260] ss:$24 sm:$0xf0]
    %vm262 = vcmask 1047556
    %v263 = vsel %vm262, %v261, %v259
    %vm264 = vcmask 490496
    %v265 = vsel %vm264, %v263, %v257
    %266 = vrot.lane.b32.xlu0 %v265, 68
    %v267 = vpop.permute.xlu0 %266
    %vm268 = vcmask 64512
    %s269 = scalar_lea.vmem %s1, 40
    %270 = vst.msk [vmem:[%s269] sm:$0xff] %vm268, %v267
    %vm271 = vcmask 1048096
    %s272 = scalar_lea.vmem %s1, 32
    %273 = vst.msk [vmem:[%s272] sm:$0xff] %vm271, %v267
    %s274 = scalar_lea.vmem [#allocation0], 209
    %v275 = vld [vmem:[%s274] ss:$24 sm:$0xf]
    %s276 = scalar_lea.vmem [#allocation0], 193
    %v277 = vld [vmem:[%s276] ss:$24 sm:$0xf]
    %s278 = scalar_lea.vmem [#allocation0], 105
    %v279 = vld [vmem:[%s278] ss:$24 sm:$0xf0]
    %vm280 = vcmask 1047556
    %v281 = vsel %vm280, %v279, %v277
    %vm282 = vcmask 490496
    %v283 = vsel %vm282, %v281, %v275
    %284 = vrot.lane.b32.xlu0 %v283, 68
    %v285 = vpop.permute.xlu0 %284
    %vm286 = vcmask 64512
    %s287 = scalar_lea.vmem %s1, 88
    %288 = vst.msk [vmem:[%s287] sm:$0xf] %vm286, %v285
    %vm289 = vcmask 1048096
    %s290 = scalar_lea.vmem %s1, 64
    %291 = vst.msk [vmem:[%s290] sm:$0xf] %vm289, %v285
    %s292 = scalar_lea.vmem %s1, 68
    %293 = vst.msk [vmem:[%s292] sm:$0xf0] %vm289, %v285
    %s294 = scalar_lea.vmem [#allocation0], 9
    %v295 = vld [vmem:[%s294] ss:$24 sm:$0xf]
    %s296 = scalar_lea.vmem [#allocation0], 9
    %v297 = vld [vmem:[%s296] ss:$24 sm:$0xf0]
    %vm298 = vcmask 1047556
    %v299 = vsel %vm298, %v297, %v295
    %s300 = scalar_lea.vmem [#allocation0], 1
    %v301 = vld [vmem:[%s300] ss:$24 sm:$0xf]
    %s302 = scalar_lea.vmem [#allocation0], 1
    %v303 = vld [vmem:[%s302] ss:$24 sm:$0xf0]
    %vm304 = vcmask 1047556
    %v305 = vsel %vm304, %v303, %v301
    %vm306 = vcmask 490496
    %v307 = vsel %vm306, %v305, %v299
    %308 = vrot.lane.b32.xlu0 %v307, 68
    %v309 = vpop.permute.xlu0 %308
    %vm310 = vcmask 556032
    %s311 = scalar_lea.vmem %s1, 32
    %312 = vst.msk [vmem:[%s311] sm:$0xff] %vm310, %v309
    %vm313 = vcmask 1048096
    %s314 = scalar_lea.vmem %s1, 16
    %315 = vst.msk [vmem:[%s314] sm:$0xff] %vm313, %v309
    %s316 = scalar_lea.vmem [#allocation0], 193
    %v317 = vld [vmem:[%s316] ss:$24 sm:$0xf]
    %s318 = scalar_lea.vmem [#allocation0], 105
    %v319 = vld [vmem:[%s318] ss:$24 sm:$0xf0]
    %vm320 = vcmask 1047556
    %v321 = vsel %vm320, %v319, %v317
    %s322 = scalar_lea.vmem [#allocation0], 209
    %v323 = vld [vmem:[%s322] ss:$24 sm:$0xf]
    %s324 = scalar_lea.vmem [#allocation0], 4294967209
    %v325 = vld [vmem:[%s324] ss:$24 sm:$0xf0]
    %vm326 = vcmask 1047556
    %v327 = vsel %vm326, %v325, %v323
    %vm328 = vcmask 490496
    %v329 = vsel %vm328, %v327, %v321
    %330 = vrot.lane.b32.xlu0 %v329, 68
    %v331 = vpop.permute.xlu0 %330
    %vm332 = vcmask 556032
    %s333 = scalar_lea.vmem %s1, 72
    %334 = vst.msk [vmem:[%s333] sm:$0xf] %vm332, %v331
    %s335 = scalar_lea.vmem %s1, 76
    %336 = vst.msk [vmem:[%s335] sm:$0xf0] %vm332, %v331
    %vm337 = vcmask 1048096
    %s338 = scalar_lea.vmem %s1, 80
    %339 = vst.msk [vmem:[%s338] sm:$0xf] %vm337, %v331
    %s340 = scalar_lea.vmem %s1, 20
    %341 = vst.msk [vmem:[%s340] sm:$0xf0] %vm337, %v331
    %s342 = scalar_lea.vmem [#allocation0], 1
    %v343 = vld [vmem:[%s342] ss:$24 sm:$0xf]
    %s344 = scalar_lea.vmem [#allocation0], 1
    %v345 = vld [vmem:[%s344] ss:$24 sm:$0xf0]
    %vm346 = vcmask 1047556
    %v347 = vsel %vm346, %v345, %v343
    %s348 = scalar_lea.vmem [#allocation0], 105
    %v349 = vld [vmem:[%s348] ss:$24 sm:$0xf]
    %vm350 = vcmask 490496
    %v351 = vsel %vm350, %v349, %v347
    %352 = vrot.lane.b32.xlu0 %v351, 68
    %v353 = vpop.permute.xlu0 %352
    %vm354 = vcmask 556032
    %s355 = scalar_lea.vmem %s1, 24
    %356 = vst.msk [vmem:[%s355] sm:$0xff] %vm354, %v353
    %vm357 = vcmask 1048096
    %s358 = scalar_lea.vmem %s1, 28
    %359 = vst.msk [vmem:[%s358] sm:$0xf] %vm357, %v353

// kernel: model_forward.1
$region0: #{model_forward.1}
  #allocation0 [shape = 'u32[]', space=smem, size = 0x4, offset = 0x4, fixed_abs, tag = 'smem constant byte address 0x4 - core index']
  #allocation1 [shape = 'u32[144,128]{1,0:T(1,128)}', space=vmem, size = 0x12000, scoped, tag = 'internal scratch']
  %s0 = inlined_call_operand.vmem [shape: f32[12,27], index: 0, kind: input, shape index: {}]
  %s1 = inlined_call_operand.vmem [shape: f32[1,27,648], index: 1, kind: input, shape index: {}]
  %s2 = inlined_call_operand.vmem [shape: f32[12,648], index: 2, kind: input, shape index: {}]
  %s3 = inlined_call_operand.vmem [shape: f32[1,12,648], index: 3, kind: output, shape index: {}]
  %s4 = sld [smem:[#allocation0]]
  $region22: #{model_forward.1} parent=0
    _
  %s6 = ssub.s32 1, %s4
  %s7 = scalar_select 0, %s6, %s4
  // Predicated region
  $region2: #{model_forward.1} parent=0 // pred_check
    _
  $region3: #{model_forward.1} parent=0 // pred_check_branch
    %9 = sbr.rel (0) target = $region5
  $region4: #{model_forward.1} parent=0 // pred_region
    _
  $region5: #{model_forward.1} parent=0 // pred_fallthru
    _
  // Predicated region
  $region6: #{model_forward.1} parent=0 // pred_check
    _
  $region7: #{model_forward.1} parent=0 // pred_check_branch
    %11 = sbr.rel (0) target = $region9
  $region8: #{model_forward.1} parent=0 // pred_region
    _
  $region9: #{model_forward.1} parent=0 // pred_fallthru
    _
  // Predicated region
  $region10: #{model_forward.1} parent=0 // pred_check
    _
  $region11: #{model_forward.1} parent=0 // pred_check_branch
    %13 = sbr.rel (0) target = $region13
  $region12: #{model_forward.1} parent=0 // pred_region
    _
  $region13: #{model_forward.1} parent=0 // pred_fallthru
    _
  %v14 = vld [vmem:[%s0] sm:$0xff]
  %v15 = vld [vmem:[%s0 + $0x8] sm:$0xf]
  %v16 = vld [vmem:[%s1] sm:$0xff]
  %v17 = vld [vmem:[%s1 + $0x8] sm:$0xff]
  %v18 = vld [vmem:[%s1 + $0x10] sm:$0xff]
  %v19 = vld [vmem:[%s1 + $0x18] sm:$0xff]
  %v20 = vld [vmem:[%s1 + $0x20] sm:$0xff]
  %v21 = vld [vmem:[%s1 + $0x28] sm:$0xff]
  %v22 = vld [vmem:[%s1 + $0x30] sm:$0xff]
  %v23 = vld [vmem:[%s1 + $0x38] sm:$0xff]
  %v24 = vld [vmem:[%s1 + $0x40] sm:$0xff]
  %v25 = vld [vmem:[%s1 + $0x48] sm:$0xff]
  %v26 = vld [vmem:[%s1 + $0x50] sm:$0xff]
  %v27 = vld [vmem:[%s1 + $0x58] sm:$0xff]
  %v28 = vld [vmem:[%s1 + $0x60] sm:$0xff]
  %v29 = vld [vmem:[%s1 + $0x68] sm:$0xff]
  %v30 = vld [vmem:[%s1 + $0x70] sm:$0xff]
  %v31 = vld [vmem:[%s1 + $0x78] sm:$0xff]
  %v32 = vld [vmem:[%s1 + $0x80] sm:$0xff]
  %v33 = vld [vmem:[%s1 + $0x88] sm:$0xff]
  %v34 = vld [vmem:[%s1 + $0x90] sm:$0x7]
  %v35 = vld [vmem:[%s1 + $0x98] sm:$0x7]
  %v36 = vld [vmem:[%s1 + $0xa0] sm:$0x7]
  %v37 = vld [vmem:[%s1 + $0xa8] sm:$0x7]
  %v38 = vld [vmem:[%s1 + $0xb0] sm:$0x7]
  %v39 = vld [vmem:[%s1 + $0xb8] sm:$0x7]
  %v40 = vld [vmem:[%s2] sm:$0xff]
  %v41 = vld [vmem:[%s2 + $0x8] sm:$0xff]
  %v42 = vld [vmem:[%s2 + $0x10] sm:$0xff]
  %v43 = vld [vmem:[%s2 + $0x18] sm:$0xff]
  %v44 = vld [vmem:[%s2 + $0x20] sm:$0xff]
  %v45 = vld [vmem:[%s2 + $0x28] sm:$0xff]
  %v46 = vld [vmem:[%s2 + $0x30] sm:$0xf]
  %v47 = vld [vmem:[%s2 + $0x38] sm:$0xf]
  %v48 = vld [vmem:[%s2 + $0x40] sm:$0xf]
  %v49 = vld [vmem:[%s2 + $0x48] sm:$0xf]
  %v50 = vld [vmem:[%s2 + $0x50] sm:$0xf]
  %v51 = vld [vmem:[%s2 + $0x58] sm:$0xf]
  %vm52 = vcmask 220160
  %v54 = vsel %vm52, %v14, 0
  %v57 = vsel %vm52, %v15, 0
  %vm59 = vcmask 1042432
  %v61 = vsel %vm59, %v34, 0
  %v64 = vsel %vm59, %v35, 0
  %v67 = vsel %vm59, %v36, 0
  %v70 = vsel %vm59, %v37, 0
  %v73 = vsel %vm59, %v38, 0
  %v76 = vsel %vm59, %v39, 0
  %78 = vmatprep.subr.mxu0 %v17
  %79 = vmatpush1.msra.mxu0 %v16
  %80 = vmatprep.subr.mxu0 %v23
  %81 = vmatpush1.msra.mxu0 %v22
  %82 = vmatprep.subr.mxu0 %v29
  %83 = vmatpush1.msra.mxu0 %v28
  %84 = vmatprep.subr.mxu0 %v64
  %85 = vmatpush1.msra.mxu0 %v61
  %86 = vmatprep.subr.mxu0 0.0
  %87 = vmatpush1.msra.mxu0 0.0
  %88 = vmatprep.subr.mxu0 0.0
  %89 = vmatpush1.msra.mxu0 0.0
  %90 = vmatprep.subr.mxu0 0.0
  %91 = vmatpush1.msra.mxu0 0.0
  %92 = vmatprep.subr.mxu0 0.0
  %93 = vmatpush1.msra.mxu0 0.0
  %94 = vmatprep.subr.mxu0 0.0
  %95 = vmatpush1.msra.mxu0 0.0
  %96 = vmatprep.subr.mxu0 0.0
  %97 = vmatpush1.msra.mxu0 0.0
  %98 = vmatprep.subr.mxu0 0.0
  %99 = vmatpush1.msra.mxu0 0.0
  %100 = vmatprep.subr.mxu0 0.0
  %101 = vmatpush1.msra.mxu0 0.0
  %102 = vmatprep.subr.mxu0 0.0
  %103 = vmatpush1.msra.mxu0 0.0
  %104 = vmatprep.subr.mxu0 0.0
  %105 = vmatpush1.msra.mxu0 0.0
  %106 = vmatprep.subr.mxu0 0.0
  %107 = vmatpush1.msra.mxu0 0.0
  %108 = vmatprep.subr.mxu0 0.0
  %109 = vmatpush1.msra.mxu0 0.0
  %110 = vmatprep.subr.mxu0 0.0
  %111 = vmatpush1.msra.mxu0 0.0
  %112 = vmatprep.subr.mxu0 0.0
  %113 = vmatpush1.msra.mxu0 0.0
  %114 = vmatprep.subr.mxu0 0.0
  %115 = vmatpush1.msra.mxu0 0.0
  %116 = vmatprep.subr.mxu0 0.0
  %117 = vmatpush1.msra.mxu0 0.0
  %118 = vmatprep.subr.mxu0 0.0
  %119 = vmatpush1.msra.mxu0 0.0
  %120 = vmatprep.subr.mxu0 0.0
  %121 = vmatpush1.msra.mxu0 0.0
  %122 = vmatprep.subr.mxu0 0.0
  %123 = vmatpush1.msra.mxu0 0.0
  %124 = vmatprep.subr.mxu0 0.0
  %125 = vmatpush1.msra.mxu0 0.0
  %126 = vmatprep.subr.mxu0 0.0
  %127 = vmatpush1.msra.mxu0 0.0
  %128 = vmatprep.subr.mxu0 0.0
  %129 = vmatpush1.msra.mxu0 0.0
  %130 = vmatprep.subr.mxu0 0.0
  %131 = vmatpush1.msra.mxu0 0.0
  %132 = vmatprep.subr.mxu0 0.0
  %133 = vmatpush1.msra.mxu0 0.0
  %134 = vmatprep.subr.mxu0 0.0
  %135 = vmatpush1.msra.mxu0 0.0
  %136 = vmatprep.subr.mxu0 0.0
  %137 = vmatpush1.msra.mxu0 0.0
  %138 = vmatprep.subr.mxu0 0.0
  %139 = vmatpush1.msra.mxu0 0.0
  %140 = vmatprep.subr.mxu0 0.0
  %141 = vmatpush1.msra.mxu0 0.0
  %142 = vmatprep.mubr.f32.mxu0 0.0
  %143 = vmatmul.mubr.f32.gmra.mrb[0].mxu0 %v54
  %v144 = vpop.f32.mrb[0].mxu0
  %v145 = vadd.f32 %v40, %v144
  %v146 = vpop.f32.mrb[0].mxu0
  %v147 = vadd.f32 %v41, %v146
  %148 = vmatprep.mubr.f32.mxu0 0.0
  %149 = vmatmul.mubr.f32.gmra.mrb[0].mxu0 %v57
  %v150 = vpop.f32.mrb[0].mxu0
  %v151 = vadd.f32 %v46, %v150
  %v152 = vpop.f32.mrb[0].mxu0
  %v153 = vadd.f32 %v47, %v152
  %154 = vdwg.mxu0
  %155 = vmatprep.subr.mxu0 %v19
  %156 = vmatpush1.msra.mxu0 %v18
  %157 = vmatprep.subr.mxu0 %v25
  %158 = vmatpush1.msra.mxu0 %v24
  %159 = vmatprep.subr.mxu0 %v31
  %160 = vmatpush1.msra.mxu0 %v30
  %161 = vmatprep.subr.mxu0 %v70
  %162 = vmatpush1.msra.mxu0 %v67
  %163 = vmatprep.subr.mxu0 0.0
  %164 = vmatpush1.msra.mxu0 0.0
  %165 = vmatprep.subr.mxu0 0.0
  %166 = vmatpush1.msra.mxu0 0.0
  %167 = vmatprep.subr.mxu0 0.0
  %168 = vmatpush1.msra.mxu0 0.0
  %169 = vmatprep.subr.mxu0 0.0
  %170 = vmatpush1.msra.mxu0 0.0
  %171 = vmatprep.subr.mxu0 0.0
  %172 = vmatpush1.msra.mxu0 0.0
  %173 = vmatprep.subr.mxu0 0.0
  %174 = vmatpush1.msra.mxu0 0.0
  %175 = vmatprep.subr.mxu0 0.0
  %176 = vmatpush1.msra.mxu0 0.0
  %177 = vmatprep.subr.mxu0 0.0
  %178 = vmatpush1.msra.mxu0 0.0
  %179 = vmatprep.subr.mxu0 0.0
  %180 = vmatpush1.msra.mxu0 0.0
  %181 = vmatprep.subr.mxu0 0.0
  %182 = vmatpush1.msra.mxu0 0.0
  %183 = vmatprep.subr.mxu0 0.0
  %184 = vmatpush1.msra.mxu0 0.0
  %185 = vmatprep.subr.mxu0 0.0
  %186 = vmatpush1.msra.mxu0 0.0
  %187 = vmatprep.subr.mxu0 0.0
  %188 = vmatpush1.msra.mxu0 0.0
  %189 = vmatprep.subr.mxu0 0.0
  %190 = vmatpush1.msra.mxu0 0.0
  %191 = vmatprep.subr.mxu0 0.0
  %192 = vmatpush1.msra.mxu0 0.0
  %193 = vmatprep.subr.mxu0 0.0
  %194 = vmatpush1.msra.mxu0 0.0
  %195 = vmatprep.subr.mxu0 0.0
  %196 = vmatpush1.msra.mxu0 0.0
  %197 = vmatprep.subr.mxu0 0.0
  %198 = vmatpush1.msra.mxu0 0.0
  %199 = vmatprep.subr.mxu0 0.0
  %200 = vmatpush1.msra.mxu0 0.0
  %201 = vmatprep.subr.mxu0 0.0
  %202 = vmatpush1.msra.mxu0 0.0
  %203 = vmatprep.subr.mxu0 0.0
  %204 = vmatpush1.msra.mxu0 0.0
  %205 = vmatprep.subr.mxu0 0.0
  %206 = vmatpush1.msra.mxu0 0.0
  %207 = vmatprep.subr.mxu0 0.0
  %208 = vmatpush1.msra.mxu0 0.0
  %209 = vmatprep.subr.mxu0 0.0
  %210 = vmatpush1.msra.mxu0 0.0
  %211 = vmatprep.subr.mxu0 0.0
  %212 = vmatpush1.msra.mxu0 0.0
  %213 = vmatprep.subr.mxu0 0.0
  %214 = vmatpush1.msra.mxu0 0.0
  %215 = vmatprep.subr.mxu0 0.0
  %216 = vmatpush1.msra.mxu0 0.0
  %217 = vmatprep.subr.mxu0 0.0
  %218 = vmatpush1.msra.mxu0 0.0
  %219 = vmatprep.mubr.f32.mxu0 0.0
  %220 = vmatmul.mubr.f32.gmra.mrb[0].mxu0 %v54
  %v221 = vpop.f32.mrb[0].mxu0
  %v222 = vadd.f32 %v42, %v221
  %v223 = vpop.f32.mrb[0].mxu0
  %v224 = vadd.f32 %v43, %v223
  %225 = vmatprep.mubr.f32.mxu0 0.0
  %226 = vmatmul.mubr.f32.gmra.mrb[0].mxu0 %v57
  %v227 = vpop.f32.mrb[0].mxu0
  %v228 = vadd.f32 %v48, %v227
  %v229 = vpop.f32.mrb[0].mxu0
  %v230 = vadd.f32 %v49, %v229
  %231 = vdwg.mxu0
  %232 = vmatprep.subr.mxu0 %v21
  %233 = vmatpush1.msra.mxu0 %v20
  %234 = vmatprep.subr.mxu0 %v27
  %235 = vmatpush1.msra.mxu0 %v26
  %236 = vmatprep.subr.mxu0 %v33
  %237 = vmatpush1.msra.mxu0 %v32
  %238 = vmatprep.subr.mxu0 %v76
  %239 = vmatpush1.msra.mxu0 %v73
  %240 = vmatprep.subr.mxu0 0.0
  %241 = vmatpush1.msra.mxu0 0.0
  %242 = vmatprep.subr.mxu0 0.0
  %243 = vmatpush1.msra.mxu0 0.0
  %244 = vmatprep.subr.mxu0 0.0
  %245 = vmatpush1.msra.mxu0 0.0
  %246 = vmatprep.subr.mxu0 0.0
  %247 = vmatpush1.msra.mxu0 0.0
  %248 = vmatprep.subr.mxu0 0.0
  %249 = vmatpush1.msra.mxu0 0.0
  %250 = vmatprep.subr.mxu0 0.0
  %251 = vmatpush1.msra.mxu0 0.0
  %252 = vmatprep.subr.mxu0 0.0
  %253 = vmatpush1.msra.mxu0 0.0
  %254 = vmatprep.subr.mxu0 0.0
  %255 = vmatpush1.msra.mxu0 0.0
  %256 = vmatprep.subr.mxu0 0.0
  %257 = vmatpush1.msra.mxu0 0.0
  %258 = vmatprep.subr.mxu0 0.0
  %259 = vmatpush1.msra.mxu0 0.0
  %260 = vmatprep.subr.mxu0 0.0
  %261 = vmatpush1.msra.mxu0 0.0
  %262 = vmatprep.subr.mxu0 0.0
  %263 = vmatpush1.msra.mxu0 0.0
  %264 = vmatprep.subr.mxu0 0.0
  %265 = vmatpush1.msra.mxu0 0.0
  %266 = vmatprep.subr.mxu0 0.0
  %267 = vmatpush1.msra.mxu0 0.0
  %268 = vmatprep.subr.mxu0 0.0
  %269 = vmatpush1.msra.mxu0 0.0
  %270 = vmatprep.subr.mxu0 0.0
  %271 = vmatpush1.msra.mxu0 0.0
  %272 = vmatprep.subr.mxu0 0.0
  %273 = vmatpush1.msra.mxu0 0.0
  %274 = vmatprep.subr.mxu0 0.0
  %275 = vmatpush1.msra.mxu0 0.0
  %276 = vmatprep.subr.mxu0 0.0
  %277 = vmatpush1.msra.mxu0 0.0
  %278 = vmatprep.subr.mxu0 0.0
  %279 = vmatpush1.msra.mxu0 0.0
  %280 = vmatprep.subr.mxu0 0.0
  %281 = vmatpush1.msra.mxu0 0.0
  %282 = vmatprep.subr.mxu0 0.0
  %283 = vmatpush1.msra.mxu0 0.0
  %284 = vmatprep.subr.mxu0 0.0
  %285 = vmatpush1.msra.mxu0 0.0
  %286 = vmatprep.subr.mxu0 0.0
  %287 = vmatpush1.msra.mxu0 0.0
  %288 = vmatprep.subr.mxu0 0.0
  %289 = vmatpush1.msra.mxu0 0.0
  %290 = vmatprep.subr.mxu0 0.0
  %291 = vmatpush1.msra.mxu0 0.0
  %292 = vmatprep.subr.mxu0 0.0
  %293 = vmatpush1.msra.mxu0 0.0
  %294 = vmatprep.subr.mxu0 0.0
  %295 = vmatpush1.msra.mxu0 0.0
  %296 = vmatprep.mubr.f32.mxu0 0.0
  %297 = vmatmul.mubr.f32.gmra.mrb[0].mxu0 %v54
  %v298 = vpop.f32.mrb[0].mxu0
  %v299 = vadd.f32 %v44, %v298
  %v300 = vpop.f32.mrb[0].mxu0
  %v301 = vadd.f32 %v45, %v300
  %302 = vmatprep.mubr.f32.mxu0 0.0
  %303 = vmatmul.mubr.f32.gmra.mrb[0].mxu0 %v57
  %v304 = vpop.f32.mrb[0].mxu0
  %v305 = vadd.f32 %v50, %v304
  %v306 = vpop.f32.mrb[0].mxu0
  %v307 = vadd.f32 %v51, %v306
  %308 = vdwg.mxu0
  %v309 = vmax.f32 %v145, 0.0
  %v310 = vmax.f32 %v147, 0.0
  %v311 = vmax.f32 %v222, 0.0
  %v312 = vmax.f32 %v224, 0.0
  %v313 = vmax.f32 %v299, 0.0
  %v314 = vmax.f32 %v301, 0.0
  %v315 = vmax.f32 %v151, 0.0
  %v316 = vmax.f32 %v153, 0.0
  %v317 = vmax.f32 %v228, 0.0
  %v318 = vmax.f32 %v230, 0.0
  %v319 = vmax.f32 %v305, 0.0
  %v320 = vmax.f32 %v307, 0.0
  %321 = vst [vmem:[%s3] sm:$0xff] %v309
  %322 = vst [vmem:[%s3 + $0x8] sm:$0xff] %v310
  %323 = vst [vmem:[%s3 + $0x10] sm:$0xff] %v311
  %324 = vst [vmem:[%s3 + $0x18] sm:$0xff] %v312
  %325 = vst [vmem:[%s3 + $0x20] sm:$0xff] %v313
  %vm326 = vcmask 64512
  %327 = vst.msk [vmem:[%s3 + $0x28] sm:$0xff] %vm326, %v314
  %328 = vst [vmem:[%s3 + $0x30] sm:$0xf] %v315
  %329 = vst [vmem:[%s3 + $0x38] sm:$0xf] %v316
  %330 = vst [vmem:[%s3 + $0x40] sm:$0xf] %v317
  %331 = vst [vmem:[%s3 + $0x48] sm:$0xf] %v318
  %332 = vst [vmem:[%s3 + $0x50] sm:$0xf] %v319
  %vm333 = vcmask 60416
  %334 = vst.msk [vmem:[%s3 + $0x58] sm:$0xf] %vm333, %v320
  // Predicated region
  $region14: #{model_forward.1} parent=0 // pred_check
    _
  $region15: #{model_forward.1} parent=0 // pred_check_branch
    %336 = sbr.rel (0) target = $region17
  $region16: #{model_forward.1} parent=0 // pred_region
    _
  $region17: #{model_forward.1} parent=0 // pred_fallthru
    _
  // Predicated region
  $region18: #{model_forward.1} parent=0 // pred_check
    _
  $region19: #{model_forward.1} parent=0 // pred_check_branch
    %338 = sbr.rel (0) target = $region21
  $region20: #{model_forward.1} parent=0 // pred_region
    _
  $region21: #{model_forward.1} parent=0 // pred_fallthru
    _

</llo_original>
